<compile_context>
chip_gen: v7x
topology: tpu7x:2x2x1
jax: 0.10.0
libtpu: 0.0.40
codegen_flags: <defaults>
</compile_context>

<pallas_src>
import jax
import jax.numpy as jnp
from jax.experimental import pallas as pl
from jax.experimental.pallas import tpu as pltpu

BN_EPS = 1e-5


def _srm_kernel(x_ref, p_ref, o_ref):
    # x_ref: (1, TC, HW) block (native dtype); p_ref: (TC, 3) f32 folded params.
    x = x_ref[0]                                         # (TC, HW)
    hw = x.shape[1]
    xf = x.astype(jnp.float32)

    # pivot-shifted single-pass per-channel statistics along the lane axis
    pivot = xf[:, 0:1]                                   # (TC, 1) per-channel pivot
    d = xf - pivot                                       # (TC, HW)
    s = jnp.sum(d, axis=1, keepdims=True)                # (TC, 1)  sum(x - pivot)
    ss = jnp.sum(d * d, axis=1, keepdims=True)           # (TC, 1)  sum((x - pivot)^2)

    inv_hw = 1.0 / hw
    mean = pivot + s * inv_hw                            # (TC, 1)
    denom = 1.0 / max(hw - 1, 1)                         # guard hw == 1
    var_unbiased = (ss - s * s * inv_hw) * denom         # unbiased (correction=1)
    std = jnp.sqrt(jnp.maximum(var_unbiased, 0.0))       # clamp fp rounding

    # folded depthwise-conv + inference BN:  z = a_mean*mean + a_std*std + bias
    p = p_ref[...]                                       # (TC, 3)
    z = p[:, 0:1] * mean + p[:, 1:2] * std + p[:, 2:3]   # (TC, 1)

    g = jax.nn.sigmoid(z)                                # (TC, 1) f32
    o_ref[0] = x * g.astype(x.dtype)                     # broadcast over HW


def _vmem_limit_bytes():
    """Scoped VMEM limit with headroom, derived from the chip's physical VMEM."""
    try:
        phys = pltpu.get_tpu_info().vmem_capacity_bytes
    except Exception:
        phys = 64 << 20                                  # conservative (v7x-sized)
    # ~75% of physical, capped at 96 MiB (v5e/v6e: 96 MiB; v7x: 48 MiB).
    return min(96 << 20, int(phys * 3 // 4))


def _sublane_pack(itemsize):
    # rows packed per sublane group: f32 -> 8, bf16 -> 16, int8/fp8 -> 32
    return max(8, 32 // max(itemsize, 1))


def _pick_channel_tile(b, c, hw, itemsize, vmem_limit, min_steps=8):
    """Pick a channel tile for (1, tc, hw) x blocks.

    - tc is a multiple of the dtype sublane pack and divides c (or tc == c,
      full-dim block, which is always legal).
    - the x block (with lane padding) must fit (vmem_limit - headroom) / 4,
      since input and output blocks are each double-buffered.
    - prefer the largest tile that still leaves >= min_steps grid steps so the
      pipeline and both v7x TensorCores have work even at small batch.
    """
    pack = _sublane_pack(itemsize)
    hw_pad = max(128, -(-hw // 128) * 128)               # lane padding to 128

    def block_bytes(d):
        d_pad = -(-d // pack) * pack                     # sublane padding
        return d_pad * hw_pad * itemsize

    max_tile_bytes = max(1 << 20, (vmem_limit - (2 << 20)) // 4)

    cands = [d for d in range(pack, c + 1, pack) if c % d == 0]
    if not cands:
        cands = [c]                                      # full-dim block is legal

    fitting = [d for d in cands if block_bytes(d) <= max_tile_bytes]
    if not fitting:
        # TODO(synk): HW-tiled stats path for huge H*W; take smallest tile.
        fitting = [min(cands)]

    good = [d for d in fitting if b * (c // d) >= min_steps]
    if good:
        return max(good)
    # Cannot reach min_steps: keep blocks multi-MiB while maximizing steps,
    # otherwise just take the biggest fitting tile.
    big = [d for d in fitting if block_bytes(d) >= (2 << 20)]
    return min(big) if big else max(fitting)


def srm_forward(x, cfc_weight, bn_gamma, bn_beta, bn_rmean, bn_rvar):
    """x: (B, C, H, W). cfc_weight: (C, 2). bn_*: (C,). Returns (B, C, H, W)."""
    b, c, h, w = x.shape
    hw = h * w
    x_flat = x.reshape(b, c, hw)                         # native dtype on the wire
    itemsize = jnp.dtype(x.dtype).itemsize

    # Fold conv1d(k=2, depthwise) + eval BatchNorm1d into 3 per-channel consts.
    inv = bn_gamma.astype(jnp.float32) * jax.lax.rsqrt(
        bn_rvar.astype(jnp.float32) + BN_EPS)
    wf = cfc_weight.astype(jnp.float32)
    a_mean = wf[:, 0] * inv
    a_std = wf[:, 1] * inv
    bias = bn_beta.astype(jnp.float32) - bn_rmean.astype(jnp.float32) * inv
    params = jnp.stack([a_mean, a_std, bias], axis=1)    # (C, 3) f32, sublane=C

    vmem_limit = _vmem_limit_bytes()
    tc = _pick_channel_tile(b, c, hw, itemsize, vmem_limit)
    n_cblk = c // tc
    grid = (n_cblk, b)                                   # params constant over fast axis

    cost = pl.CostEstimate(
        flops=6 * b * c * hw,
        transcendentals=3 * b * c,
        bytes_accessed=2 * b * c * hw * itemsize + c * 3 * 4,
    )

    out = pl.pallas_call(
        _srm_kernel,
        out_shape=jax.ShapeDtypeStruct((b, c, hw), x.dtype),
        grid_spec=pltpu.PrefetchScalarGridSpec(
            num_scalar_prefetch=0,
            grid=grid,
            in_specs=[
                pl.BlockSpec((1, tc, hw), lambda j, i: (i, j, 0)),
                pl.BlockSpec((tc, 3), lambda j, i: (j, 0)),
            ],
            out_specs=pl.BlockSpec((1, tc, hw), lambda j, i: (i, j, 0)),
        ),
        compiler_params=pltpu.CompilerParams(
            dimension_semantics=("parallel", "parallel"),
            vmem_limit_bytes=vmem_limit,
        ),
        cost_estimate=cost,
    )(x_flat, params)

    return out.reshape(b, c, h, w)


def srm_reference(x, cfc_weight, bn_gamma, bn_beta, bn_rmean, bn_rvar):
    b, c, h, w = x.shape
    xf = x.reshape(b, c, -1).astype(jnp.float32)
    mean = xf.mean(-1)                                                # (B, C)
    std = jnp.sqrt(jnp.sum((xf - mean[..., None]) ** 2, -1) / (h * w - 1))
    z = cfc_weight[None, :, 0] * mean + cfc_weight[None, :, 1] * std
    z = (z - bn_rmean[None]) / jnp.sqrt(bn_rvar[None] + BN_EPS) * bn_gamma[None] + bn_beta[None]
    g = jax.nn.sigmoid(z)
    return x * g[:, :, None, None].astype(x.dtype)


if __name__ == "__main__":
    key = jax.random.PRNGKey(0)
    kx, kw = jax.random.split(key)

    B, C, H, W = 2, 4, 16, 16
    x = jax.random.normal(kx, (B, C, H, W), dtype=jnp.float32)

    # deterministic parameter init (shapes from SRM.__init__ with channel=C)
    cfc_weight = jax.random.normal(kw, (C, 2), dtype=jnp.float32) * 0.1  # Conv1d (C,1,2) squeezed
    bn_gamma = jnp.ones((C,), jnp.float32)
    bn_beta = jnp.zeros((C,), jnp.float32)
    bn_rmean = jnp.zeros((C,), jnp.float32)
    bn_rvar = jnp.ones((C,), jnp.float32)

    out = srm_forward(x, cfc_weight, bn_gamma, bn_beta, bn_rmean, bn_rvar)
    jax.block_until_ready(out)

    ref = srm_reference(x, cfc_weight, bn_gamma, bn_beta, bn_rmean, bn_rvar)
    assert jnp.allclose(out, ref, atol=1e-5, rtol=1e-5), "mismatch vs reference"

    print("KERNEL_OK")
</pallas_src>

<mosaic_0001>
module attributes {stable_mosaic.version = 11 : i64} {
  func.func @_srm_kernel(%arg0: i32, %arg1: i32, %arg2: memref<1x4x256xf32, #tpu.memory_space<vmem>>, %arg3: memref<4x3xf32, #tpu.memory_space<vmem>>, %arg4: memref<1x4x256xf32, #tpu.memory_space<vmem>>) attributes {dimension_semantics = [#tpu.dimension_semantics<parallel>, #tpu.dimension_semantics<parallel>], iteration_bounds = array<i64: 1, 2>, scalar_prefetch = 0 : i64, scratch_operands = 0 : i64, tpu.core_type = #tpu.core_type<tc>, window_params = [{transform_indices = @transform_0, window_bounds = array<i64: 1, 4, 256>}, {transform_indices = @transform_1, window_bounds = array<i64: 4, 3>}, {transform_indices = @transform_2, window_bounds = array<i64: 1, 4, 256>}]} {
    %c0 = arith.constant 0 : index
    %c0_0 = arith.constant 0 : index
    %c0_1 = arith.constant 0 : index
    %0 = vector.load %arg2[%c0, %c0_0, %c0_1] : memref<1x4x256xf32, #tpu.memory_space<vmem>>, vector<1x4x256xf32>
    %1 = vector.shape_cast %0 : vector<1x4x256xf32> to vector<4x256xf32>
    %2 = vector.extract_strided_slice %1 {offsets = [0, 0], sizes = [4, 1], strides = [1, 1]} : vector<4x256xf32> to vector<4x1xf32>
    %3 = vector.broadcast %2 : vector<4x1xf32> to vector<4x256xf32>
    %4 = arith.subf %1, %3 : vector<4x256xf32>
    %cst = arith.constant dense<0.000000e+00> : vector<4xf32>
    %5 = vector.multi_reduction <add>, %4, %cst [1] : vector<4x256xf32> to vector<4xf32>
    %6 = vector.shape_cast %5 : vector<4xf32> to vector<4x1xf32>
    %7 = arith.mulf %4, %4 : vector<4x256xf32>
    %cst_2 = arith.constant dense<0.000000e+00> : vector<4xf32>
    %8 = vector.multi_reduction <add>, %7, %cst_2 [1] : vector<4x256xf32> to vector<4xf32>
    %9 = vector.shape_cast %8 : vector<4xf32> to vector<4x1xf32>
    %cst_3 = arith.constant 3.906250e-03 : f32
    %10 = vector.broadcast %cst_3 : f32 to vector<4x1xf32>
    %11 = arith.mulf %6, %10 : vector<4x1xf32>
    %12 = arith.addf %2, %11 : vector<4x1xf32>
    %13 = arith.mulf %6, %6 : vector<4x1xf32>
    %cst_4 = arith.constant 3.906250e-03 : f32
    %14 = vector.broadcast %cst_4 : f32 to vector<4x1xf32>
    %15 = arith.mulf %13, %14 : vector<4x1xf32>
    %16 = arith.subf %9, %15 : vector<4x1xf32>
    %cst_5 = arith.constant 0.00392156886 : f32
    %17 = vector.broadcast %cst_5 : f32 to vector<4x1xf32>
    %18 = arith.mulf %16, %17 : vector<4x1xf32>
    %cst_6 = arith.constant 0.000000e+00 : f32
    %19 = vector.broadcast %cst_6 : f32 to vector<4x1xf32>
    %20 = arith.maximumf %18, %19 : vector<4x1xf32>
    %21 = math.sqrt %20 : vector<4x1xf32>
    %c0_7 = arith.constant 0 : index
    %c0_8 = arith.constant 0 : index
    %22 = vector.load %arg3[%c0_7, %c0_8] : memref<4x3xf32, #tpu.memory_space<vmem>>, vector<4x3xf32>
    %23 = vector.extract_strided_slice %22 {offsets = [0, 0], sizes = [4, 1], strides = [1, 1]} : vector<4x3xf32> to vector<4x1xf32>
    %24 = arith.mulf %23, %12 : vector<4x1xf32>
    %25 = vector.extract_strided_slice %22 {offsets = [0, 1], sizes = [4, 1], strides = [1, 1]} : vector<4x3xf32> to vector<4x1xf32>
    %26 = arith.mulf %25, %21 : vector<4x1xf32>
    %27 = arith.addf %24, %26 : vector<4x1xf32>
    %28 = vector.extract_strided_slice %22 {offsets = [0, 2], sizes = [4, 1], strides = [1, 1]} : vector<4x3xf32> to vector<4x1xf32>
    %29 = arith.addf %27, %28 : vector<4x1xf32>
    %30 = arith.negf %29 : vector<4x1xf32>
    %31 = math.exp %30 : vector<4x1xf32>
    %cst_9 = arith.constant 1.000000e+00 : f32
    %32 = vector.broadcast %cst_9 : f32 to vector<4x1xf32>
    %33 = arith.addf %32, %31 : vector<4x1xf32>
    %34 = arith.divf %32, %33 : vector<4x1xf32>
    %35 = vector.broadcast %34 : vector<4x1xf32> to vector<4x256xf32>
    %36 = arith.mulf %1, %35 : vector<4x256xf32>
    %c0_10 = arith.constant 0 : index
    %c0_11 = arith.constant 0 : index
    %c0_12 = arith.constant 0 : index
    %37 = vector.load %arg4[%c0_10, %c0_11, %c0_12] : memref<1x4x256xf32, #tpu.memory_space<vmem>>, vector<1x4x256xf32>
    %38 = vector.shape_cast %37 : vector<1x4x256xf32> to vector<4x256xf32>
    %39 = vector.shape_cast %36 : vector<4x256xf32> to vector<1x4x256xf32>
    tpu.vector_store %arg4[%c0_10, %c0_11, %c0_12], %39 {strides = array<i32>} : memref<1x4x256xf32, #tpu.memory_space<vmem>>, vector<1x4x256xf32>,
    return
  }
  func.func @transform_0(%arg0: i32, %arg1: i32) -> (i32, i32, i32) {
    %c0_i32 = arith.constant 0 : i32
    %c0_i32_0 = arith.constant 0 : i32
    return %arg1, %arg0, %c0_i32 : i32, i32, i32
  }
  func.func @transform_1(%arg0: i32, %arg1: i32) -> (i32, i32) {
    %c0_i32 = arith.constant 0 : i32
    %c0_i32_0 = arith.constant 0 : i32
    return %arg0, %c0_i32 : i32, i32
  }
  func.func @transform_2(%arg0: i32, %arg1: i32) -> (i32, i32, i32) {
    %c0_i32 = arith.constant 0 : i32
    %c0_i32_0 = arith.constant 0 : i32
    return %arg1, %arg0, %c0_i32 : i32, i32, i32
  }
}

</mosaic_0001>

<llo_original>
// kernel: tpu_custom_call.1
$region0: #{tpu_custom_call.1}
  #allocation0 [shape = 'u32[]', space=smem, size = 0x4, offset = 0x4, fixed_abs, tag = 'smem constant byte address 0x4 - core index']
  #allocation1 [shape = 'u32[144,128]{1,0:T(1,128)}', space=vmem, size = 0x12000, scoped, tag = 'internal scratch']
  %s0 = inlined_call_operand.hbm [shape: f32[2,4,256], index: 0, kind: input, shape index: {}]
  %s1 = inlined_call_operand.hbm [shape: f32[4,3], index: 1, kind: input, shape index: {}]
  %s2 = inlined_call_operand.hbm [shape: f32[2,4,256], index: 2, kind: output, shape index: {}]
  %s3 = sld [smem:[#allocation0]]
  $region49: #{tpu_custom_call.1} parent=0
    _
  %s5 = ssub.s32 1, %s3
  %s6 = scalar_select 0, %s5, %s3
  $region1: #{tpu_custom_call.1} parent=0
    #allocation2 [shape = 'u8[8192]{0}', space=vmem, size = 0x2000, scoped, tag = 'input window, operand 0']
    #allocation3 [shape = 's32[2]{0}', space=sflag, size = 0x8, scoped, tag = 'scoped memory for tpu_custom_call.1']
    #allocation4 [shape = 's32[2]{0}', space=sflag, size = 0x8, scoped, tag = 'scoped memory for tpu_custom_call.1']
    #allocation5 [shape = 'u8[2048]{0}', space=vmem, size = 0x800, scoped, tag = 'input window, operand 1, single buffered']
    #allocation6 [shape = 's32[1]{0}', space=sflag, size = 0x4, scoped, tag = 'scoped memory for tpu_custom_call.1']
    #allocation7 [shape = 'u8[8192]{0}', space=vmem, size = 0x2000, scoped, tag = 'output window, operand 0']
    %7 = vsyncpa [#allocation3], 0
    %s8 = scalar_lea.sflag [#allocation3], 1
    %9 = vsyncpa %s8, 0
    %10 = vsyncpa [#allocation6], 0
    %11 = vsyncpa [#allocation4], 0
    %s12 = scalar_lea.sflag [#allocation4], 1
    %13 = vsyncpa %s12, 0
    loop: start=0, step=1, limit=4
    $region2: #{tpu_custom_call.1} parent=1 // loop_pre_header
      _
    $region3: #{tpu_custom_call.1} parent=1 // loop_header
      %s15 = sphi 0, %s19
      %p16 = scmp.ge.s32.totalorder %s15, 4
      %s22 = sphi 0, %s34
      %s23 = sphi 0, %s30
      %s24 = sphi 0, %s22
      %s25 = sphi 0, %s23
      %s26 = sphi 0, %s24
      %s27 = sphi 0, %s25
      %s39 = sphi 0, %s41
      %s42 = sphi 0, %s39
      %s43 = sphi 0, %s42
      %s59 = sphi 0, %s43
      %s65 = sphi 0, %s67
      %s68 = sphi 0, %s65
      %s69 = sphi 0, %s68
      %s85 = sphi 0, %s69
      %s93 = sphi 0, %s95
      %s96 = sphi 0, %s93
      %s97 = sphi 0, %s96
      %s113 = sphi 0, %s97
    $region4: #{tpu_custom_call.1} parent=1 // loop_header_branch
      %18 = sbr.rel (%p16) target = $region8
    $region5: #{tpu_custom_call.1} parent=1 // loop_body
      %s20 = ssub.s32 %s15, 1
      %s21 = ssub.s32 %s15, 2
      %s28 = sadd.s32 1, %s23
      %p29 = scmp.ge.s32.totalorder %s28, 2
      %s30 = scalar_select %p29, 0, %s28
      %s31 = sadd.s32 1, %s22
      %s32 = scalar_select %p29, %s31, %s22
      %p33 = scmp.ge.s32.totalorder %s32, 1
      %s34 = scalar_select %p33, 0, %s32
      %s35 = ssub.s32 %s23, %s30
      %s36 = ssub.s32 %s22, %s34
      %s37 = sor.u32 %s35, %s36
      %p38 = scmp.eq.s32.totalorder %s37, 0
      %s40 = sadd.s32 %s39, 1
      %s41 = scalar_select %p38, %s39, %s40
      %p44 = pneg %p38
      %p45 = scmp.eq.s32.totalorder %s15, 1
      %p46 = por %p44, %p45
      %p47 = scmp.ne.s32.totalorder %s39, %s42
      %p48 = scmp.eq.s32.totalorder %s15, 0
      %p49 = por %p47, %p48
      %p50 = scmp.ne.s32.totalorder %s39, %s42
      %p51 = scmp.eq.s32.totalorder %s20, 1
      %p52 = por %p50, %p51
      %p53 = scmp.ne.s32.totalorder %s42, %s43
      %p54 = scmp.eq.s32.totalorder %s20, 0
      %p55 = por %p53, %p54
      %p56 = scmp.ne.s32.totalorder %s42, %s43
      %p57 = scmp.eq.s32.totalorder %s21, 1
      %p58 = por %p56, %p57
      %p60 = scmp.ne.s32.totalorder %s43, %s59
      %p61 = scmp.eq.s32.totalorder %s21, 0
      %p62 = por %p60, %p61
      %s63 = ssub.s32 %s22, %s34
      %p64 = scmp.eq.s32.totalorder %s63, 0
      %s66 = sadd.s32 %s65, 1
      %s67 = scalar_select %p64, %s65, %s66
      %p70 = pneg %p64
      %p71 = scmp.eq.s32.totalorder %s15, 1
      %p72 = por %p70, %p71
      %p73 = scmp.ne.s32.totalorder %s65, %s68
      %p74 = scmp.eq.s32.totalorder %s15, 0
      %p75 = por %p73, %p74
      %p76 = scmp.ne.s32.totalorder %s65, %s68
      %p77 = scmp.eq.s32.totalorder %s20, 1
      %p78 = por %p76, %p77
      %p79 = scmp.ne.s32.totalorder %s68, %s69
      %p80 = scmp.eq.s32.totalorder %s20, 0
      %p81 = por %p79, %p80
      %p82 = scmp.ne.s32.totalorder %s68, %s69
      %p83 = scmp.eq.s32.totalorder %s21, 1
      %p84 = por %p82, %p83
      %p86 = scmp.ne.s32.totalorder %s69, %s85
      %p87 = scmp.eq.s32.totalorder %s21, 0
      %p88 = por %p86, %p87
      %s89 = ssub.s32 %s23, %s30
      %s90 = ssub.s32 %s22, %s34
      %s91 = sor.u32 %s89, %s90
      %p92 = scmp.eq.s32.totalorder %s91, 0
      %s94 = sadd.s32 %s93, 1
      %s95 = scalar_select %p92, %s93, %s94
      %p98 = pneg %p92
      %p99 = scmp.eq.s32.totalorder %s15, 1
      %p100 = por %p98, %p99
      %p101 = scmp.ne.s32.totalorder %s93, %s96
      %p102 = scmp.eq.s32.totalorder %s15, 0
      %p103 = por %p101, %p102
      %p104 = scmp.ne.s32.totalorder %s93, %s96
      %p105 = scmp.eq.s32.totalorder %s20, 1
      %p106 = por %p104, %p105
      %p107 = scmp.ne.s32.totalorder %s96, %s97
      %p108 = scmp.eq.s32.totalorder %s20, 0
      %p109 = por %p107, %p108
      %p110 = scmp.ne.s32.totalorder %s96, %s97
      %p111 = scmp.eq.s32.totalorder %s21, 1
      %p112 = por %p110, %p111
      %p114 = scmp.ne.s32.totalorder %s97, %s113
      %p115 = scmp.eq.s32.totalorder %s21, 0
      %p116 = por %p114, %p115
      %p117 = scmp.le.s32.totalorder 1, %s15
      %p118 = scmp.lt.s32.totalorder %s15, 3
      %p119 = pnand %p117, %p118
      %p120 = pneg %p119
      // Predicated region
      $region9: #{tpu_custom_call.1} parent=5 // pred_check
        _
      $region10: #{tpu_custom_call.1} parent=5 // pred_check_branch
        %122 = sbr.rel (%p119) target = $region12
      $region11: #{tpu_custom_call.1} parent=5 // pred_region
        %s123 = ssub.s32 %s15, 1
        // Predicated region
        $region13: #{tpu_custom_call.1} parent=11 // pred_check
          %p124 = pneg %p81
        $region14: #{tpu_custom_call.1} parent=11 // pred_check_branch
          %126 = sbr.rel (%p124) target = $region16
        $region15: #{tpu_custom_call.1} parent=11 // pred_region
          %s128 = ssub.s32 64, 64
          %129 = vsyncadd [#allocation6], %s128
          %s130 = smul.addr %s24, 64
          %s131 = scalar_lea.hbm %s1, %s130
          %s133 = sshll.u32 [#allocation5], 4
          %s134 = int_to_ptr.vmem [resolvable:$true] %s133
          %136 = dma.hbm_to_vmem [thread:$0]  %s131, 64, %s134, [#allocation6]
        $region16: #{tpu_custom_call.1} parent=11 // pred_fallthru
          _
      $region12: #{tpu_custom_call.1} parent=5 // pred_fallthru
        _
      %p137 = scmp.lt.s32.totalorder %s15, 2
      // Predicated region
      $region17: #{tpu_custom_call.1} parent=5 // pred_check
        %p138 = pneg %p137
      $region18: #{tpu_custom_call.1} parent=5 // pred_check_branch
        %140 = sbr.rel (%p138) target = $region20
      $region19: #{tpu_custom_call.1} parent=5 // pred_region
        // Predicated region
        $region21: #{tpu_custom_call.1} parent=19 // pred_check
          %p141 = pneg %p49
        $region22: #{tpu_custom_call.1} parent=19 // pred_check_branch
          %143 = sbr.rel (%p141) target = $region24
        $region23: #{tpu_custom_call.1} parent=19 // pred_region
          %s144 = sand.u32 %s39, 1
          %s145 = scalar_lea.sflag [#allocation3], %s144
          %s146 = sand.u32 %s39, 1
          %s147 = smul.addr %s146, 8
          %s148 = scalar_lea.vmem [#allocation2], %s147
          %s150 = ssub.s32 128, 128
          %151 = vsyncadd %s145, %s150
          %s152 = smul.addr %s22, 2
          %s153 = smul.addr %s23, 2
          %s154 = sadd.s32 %s152, %s153
          %s155 = smul.addr %s154, 64
          %s156 = scalar_lea.hbm %s0, %s155
          %s158 = sshll.u32 %s148, 4
          %s159 = int_to_ptr.vmem [resolvable:$true] %s158
          %161 = dma.hbm_to_vmem [thread:$0]  %s156, 128, %s159, %s145
        $region24: #{tpu_custom_call.1} parent=19 // pred_fallthru
          _
      $region20: #{tpu_custom_call.1} parent=5 // pred_fallthru
        _
      %p162 = scmp.le.s32.totalorder 1, %s15
      %p163 = scmp.lt.s32.totalorder %s15, 3
      %p164 = pnand %p162, %p163
      %p165 = pneg %p164
      // Predicated region
      $region25: #{tpu_custom_call.1} parent=5 // pred_check
        _
      $region26: #{tpu_custom_call.1} parent=5 // pred_check_branch
        %167 = sbr.rel (%p164) target = $region28
      $region27: #{tpu_custom_call.1} parent=5 // pred_region
        %s168 = ssub.s32 %s15, 1
        %s169 = sand.u32 %s42, 1
        %s170 = scalar_lea.sflag [#allocation3], %s169
        %s171 = sand.u32 %s42, 1
        %s172 = smul.addr %s171, 8
        %s173 = scalar_lea.vmem [#allocation2], %s172
        // Predicated region
        $region29: #{tpu_custom_call.1} parent=27 // pred_check
          %p174 = pneg %p55
        $region30: #{tpu_custom_call.1} parent=27 // pred_check_branch
          %176 = sbr.rel (%p174) target = $region32
        $region31: #{tpu_custom_call.1} parent=27 // pred_region
          %177 = dma.done %s170, 128
        $region32: #{tpu_custom_call.1} parent=27 // pred_fallthru
          _
        // Predicated region
        $region33: #{tpu_custom_call.1} parent=27 // pred_check
          %p178 = pneg %p81
        $region34: #{tpu_custom_call.1} parent=27 // pred_check_branch
          %180 = sbr.rel (%p178) target = $region36
        $region35: #{tpu_custom_call.1} parent=27 // pred_region
          %181 = dma.done [#allocation6], 64
        $region36: #{tpu_custom_call.1} parent=27 // pred_fallthru
          _
        %s182 = sand.u32 %s42, 1
        %s183 = scalar_lea.sflag [#allocation3], %s182
        %s184 = sand.u32 %s42, 1
        %s185 = smul.addr %s184, 8
        %s186 = scalar_lea.vmem [#allocation2], %s185
        %p187 = pneg %p55
        %p188 = pneg %p52
        %p189 = pneg %p81
        %p190 = pneg %p78
        %p191 = pneg %p109
        %p192 = pneg %p106
        %s193 = sand.u32 %s96, 1
        %s194 = scalar_lea.sflag [#allocation4], %s193
        %s195 = sand.u32 %s96, 1
        %s196 = smul.addr %s195, 8
        %s197 = scalar_lea.vmem [#allocation7], %s196
        %v198 = vld [vmem:[%s173] sm:$0xff]
        %200 = vset.pattern.permute.xlu0 0
        %201 = vperm.xlu0 %200, %v198
        %v202 = vpop.permute.xlu0 %201
        %v205 = vunpack.c.l.s4 839922192
        %v206 = vunpack.c.0.s8 %v205
        %v207 = vlaneseq
        %v208 = vshrl.u32 %v207, 7
        %v209 = vsub.s32 %v206, %v208
        %v210 = vrot.slane %v202, %v209
        %v211 = vsub.f32 %v198, %v210
        %v213 = vcombine.high %v211, %v211
        %vm215 = vcmask 1043456
        %v216 = vsel %vm215, %v211, 0.0
        %v217 = vsel %vm215, %v213, 0.0
        %v218 = vadd.f32 %v216, %v217
        %219 = vadd.xlane.f32.xlu0 %v218
        %v220 = vpop.xlane.xlu0 %219
        %v221 = vmul.f32 %v211, %v211
        %v223 = vcombine.high %v221, %v221
        %v225 = vsel %vm215, %v221, 0.0
        %v226 = vsel %vm215, %v223, 0.0
        %v227 = vadd.f32 %v225, %v226
        %228 = vadd.xlane.f32.xlu0 %v227
        %v229 = vpop.xlane.xlu0 %228
        %v230 = vmul.f32 %v220, 0.00390625
        %v231 = vadd.f32 %v198, %v230
        %v232 = vmul.f32 %v220, %v220
        %v233 = vmul.f32 %v232, 0.00390625
        %v234 = vsub.f32 %v229, %v233
        %v235 = vmul.f32 %v234, 0.003921569
        %v236 = vmax.f32 %v235, 0.0
        %v237 = vrsqrt.pop %v236
        %v238 = vmul.f32 %v236, %v237
        %vm239 = vcmp.eq.f32.partialorder %v236, inf
        %v240 = vsel %vm239, %v236, %v238
        %vm241 = vcmp.eq.f32.partialorder %v236, 0.0
        %v242 = vand.u32 %v236, 2147483648
        %v243 = vsel %vm241, %v242, %v240
        %v244 = vld [vmem:[#allocation5] sm:$0xf]
        %v245 = vmul.f32 %v244, %v231
        %v246 = vmul.f32 %v244, %v243
        %248 = vrot.lane.b32.xlu0 %v246, 127
        %v249 = vpop.permute.xlu0 %248
        %v251 = vadd.f32 %v245, %v249
        %253 = vrot.lane.b32.xlu0 %v244, 126
        %v254 = vpop.permute.xlu0 %253
        %v256 = vadd.f32 %v251, %v254
        %v257 = vxor.u32 %v256, 2147483648
        %v258 = vmul.f32 %v257, 1.442695
        %v259 = vpow.pop %v258
        %v260 = vadd.f32 %v259, 1.0
        %v261 = vrcp.pop %v260
        %v262 = vmul.f32 1.0, %v261
        %264 = vset.pattern.permute.xlu0 0
        %265 = vperm.xlu0 %264, %v262
        %v266 = vpop.permute.xlu0 %265
        %v268 = vunpack.c.l.s4 839922192
        %v269 = vunpack.c.0.s8 %v268
        %v270 = vlaneseq
        %v271 = vshrl.u32 %v270, 7
        %v272 = vsub.s32 %v269, %v271
        %v273 = vrot.slane %v266, %v272
        %v275 = vmul.f32 %v198, %v273
        %276 = vst [vmem:[%s197] sm:$0xff] %v275
        %s277 = sand.u32 %s96, 1
        %s278 = scalar_lea.sflag [#allocation4], %s277
        %s279 = sand.u32 %s96, 1
        %s280 = smul.addr %s279, 8
        %s281 = scalar_lea.vmem [#allocation7], %s280
        // Predicated region
        $region37: #{tpu_custom_call.1} parent=27 // pred_check
          %p282 = pneg %p106
        $region38: #{tpu_custom_call.1} parent=27 // pred_check_branch
          %284 = sbr.rel (%p282) target = $region40
        $region39: #{tpu_custom_call.1} parent=27 // pred_region
          %s286 = ssub.s32 128, 128
          %287 = vsyncadd %s278, %s286
          %s288 = smul.addr %s24, 2
          %s289 = smul.addr %s25, 2
          %s290 = sadd.s32 %s288, %s289
          %s291 = smul.addr %s290, 64
          %s292 = scalar_lea.hbm %s2, %s291
          %s294 = sshll.u32 %s281, 4
          %s295 = int_to_ptr.vmem [resolvable:$true] %s294
          %297 = dma.vmem_to_hbm [thread:$0]  %s295, 128, %s292, %s278
        $region40: #{tpu_custom_call.1} parent=27 // pred_fallthru
          _
      $region28: #{tpu_custom_call.1} parent=5 // pred_fallthru
        _
      %p298 = scmp.le.s32.totalorder 2, %s15
      // Predicated region
      $region41: #{tpu_custom_call.1} parent=5 // pred_check
        %p299 = pneg %p298
      $region42: #{tpu_custom_call.1} parent=5 // pred_check_branch
        %301 = sbr.rel (%p299) target = $region44
      $region43: #{tpu_custom_call.1} parent=5 // pred_region
        %s302 = ssub.s32 %s15, 2
        // Predicated region
        $region45: #{tpu_custom_call.1} parent=43 // pred_check
          %p303 = pneg %p112
        $region46: #{tpu_custom_call.1} parent=43 // pred_check_branch
          %305 = sbr.rel (%p303) target = $region48
        $region47: #{tpu_custom_call.1} parent=43 // pred_region
          %s306 = sand.u32 %s97, 1
          %s307 = scalar_lea.sflag [#allocation4], %s306
          %s308 = sand.u32 %s97, 1
          %s309 = smul.addr %s308, 8
          %s310 = scalar_lea.vmem [#allocation7], %s309
          %311 = dma.done %s307, 128
        $region48: #{tpu_custom_call.1} parent=43 // pred_fallthru
          _
      $region44: #{tpu_custom_call.1} parent=5 // pred_fallthru
        _
    $region6: #{tpu_custom_call.1} parent=1 // loop_footer
      %s19 = sadd.s32 1, %s15
    $region7: #{tpu_custom_call.1} parent=1 // loop_footer_branch
      %14 = sbr.rel target = $region3
    $region8: #{tpu_custom_call.1} parent=1 // loop_exit
      _
    %312 = vsyncpa [#allocation3], 1
    %s313 = scalar_lea.sflag [#allocation3], 1
    %314 = vsyncpa %s313, 1
    %315 = vsyncpa [#allocation6], 1
    %316 = vsyncpa [#allocation4], 1
    %s317 = scalar_lea.sflag [#allocation4], 1
    %318 = vsyncpa %s317, 1

</llo_original>
